<compile_context>
chip_gen: v7x
topology: tpu7x:2x2x1
jax: 0.10.0
libtpu: 0.0.40
codegen_flags: <defaults>
</compile_context>

<pallas_src>
import functools

import jax
import jax.numpy as jnp
from jax import lax
from jax.experimental import pallas as pl
from jax.experimental.pallas import tpu as pltpu


def _round_up(x, m):
    return (x + m - 1) // m * m


def _sublane_multiple(dtype):
    """Sublane packing multiple: 8 for 32-bit, 16 for 16-bit, 32 for 8-bit."""
    bits = jnp.dtype(dtype).itemsize * 8
    return max(8, 256 // bits)


def _is_v7():
    try:
        return "v7" in jax.devices()[0].device_kind.lower()
    except Exception:
        return False


def _neg_fill(dtype):
    dtype = jnp.dtype(dtype)
    if jnp.issubdtype(dtype, jnp.floating):
        return float("-inf")
    return int(jnp.iinfo(dtype).min)


def _max_reduce_kernel(x_ref, o_ref, max_acc, *, n_total, tile_n,
                       tiles_per_split, slab, ragged, fill_value):
    """Streams (tile_n, d_in) tiles of x; keeps a running (slab, d_in) f32 max."""
    i = pl.program_id(1)                      # position within this split

    @pl.when(i == 0)
    def _init():
        max_acc[...] = jnp.full_like(max_acc, -jnp.inf)

    d_in = x_ref.shape[-1]
    groups = tile_n // slab

    def _update(tile):
        # Collapse the tile to one (slab, d_in) slab: element-wise max of
        # full-sublane chunks (VALU-only, no per-step cross-sublane reduce).
        slab_max = tile.reshape(groups, slab, d_in).max(axis=0)
        max_acc[...] = jnp.maximum(max_acc[...], slab_max.astype(jnp.float32))

    if ragged:
        s = pl.program_id(0)
        start = (s * tiles_per_split + i) * tile_n
        is_tail = start + tile_n > n_total

        @pl.when(jnp.logical_not(is_tail))
        def _full_tile():
            _update(x_ref[...])

        @pl.when(is_tail)
        def _tail_tile():
            tile = x_ref[...]
            row = lax.broadcasted_iota(jnp.int32, tile.shape, 0) + start
            tile = jnp.where(row < n_total, tile,
                             jnp.array(fill_value, dtype=tile.dtype))
            _update(tile)
    else:
        _update(x_ref[...])

    @pl.when(i == tiles_per_split - 1)
    def _finalize():
        o_ref[...] = max_acc[...]


def pooling_agg(x, weight, bias, *, tile_n=None, num_splits=None):
    """x: (N, input_dim); weight: (hidden_dim, input_dim) [PyTorch layout];
    bias: (hidden_dim,).  Returns (1, hidden_dim) = Linear(max(x, axis=0))."""
    n, d_in = x.shape
    d_hid = weight.shape[0]
    itemsize = jnp.dtype(x.dtype).itemsize
    slab = _sublane_multiple(x.dtype)
    is_v7 = _is_v7()

    # --- Tile sizing by bytes streamed per step (amortize ~0.35 us/step). ---
    if tile_n is None:
        target_bytes = (4 if is_v7 else 2) * 1024 * 1024
        # Keep 2 * (double-buffered x tile) well inside default scoped VMEM
        # (32 MiB on v6e/v7x, 16 MiB on v5e) without needing vmem_limit_bytes.
        vmem_tile_budget = 12 * 1024 * 1024
        row_bytes = max(1, d_in * itemsize)
        tile_n = max(slab, target_bytes // row_bytes)
        tile_n = min(tile_n, max(slab, vmem_tile_budget // (2 * row_bytes)))
    tile_n = min(tile_n, _round_up(n, slab))
    tile_n = max(slab, _round_up(tile_n, slab))

    grid_n = pl.cdiv(n, tile_n)

    # --- v7x: shard the N stream across the 2 TensorCores. ---
    if num_splits is None:
        num_splits = 2 if is_v7 else 1
    num_splits = max(1, min(num_splits, grid_n))
    tiles_per_split = pl.cdiv(grid_n, num_splits)
    padded_rows = num_splits * tiles_per_split * tile_n
    ragged = padded_rows > n
    fill_value = _neg_fill(x.dtype)

    if num_splits * tiles_per_split == grid_n:
        x_index_map = lambda s, i: (s * tiles_per_split + i, 0)
    else:
        # Clamp padded (out-of-range) tiles to the last real block; they are
        # fully masked to the fill value inside the kernel.
        x_index_map = lambda s, i: (
            jnp.minimum(s * tiles_per_split + i, grid_n - 1), 0)

    kernel = functools.partial(
        _max_reduce_kernel, n_total=n, tile_n=tile_n,
        tiles_per_split=tiles_per_split, slab=slab, ragged=ragged,
        fill_value=fill_value)

    cost = pl.CostEstimate(
        flops=n * d_in,
        transcendentals=0,
        bytes_accessed=n * d_in * itemsize + num_splits * slab * d_in * 4,
    )

    partial_max = pl.pallas_call(
        kernel,
        out_shape=jax.ShapeDtypeStruct((num_splits * slab, d_in), jnp.float32),
        grid_spec=pltpu.PrefetchScalarGridSpec(
            num_scalar_prefetch=0,
            grid=(num_splits, tiles_per_split),
            in_specs=[pl.BlockSpec((tile_n, d_in), x_index_map)],
            out_specs=pl.BlockSpec((slab, d_in), lambda s, i: (s, 0)),
            scratch_shapes=[pltpu.VMEM((slab, d_in), jnp.float32)],
        ),
        compiler_params=pltpu.CompilerParams(
            # leading split axis parallel (megacore), inner axis is a reduction
            dimension_semantics=("parallel", "arbitrary")),
        cost_estimate=cost,
    )(x)

    # Tiny (1, d_in) GEMV + bias in plain XLA: ~1/256 of MXU rows, negligible,
    # and keeps W / b out of the kernel's pipelined VMEM footprint entirely.
    h = jnp.max(partial_max, axis=0, keepdims=True)              # (1, d_in) f32
    y = h @ weight.astype(jnp.float32).T + bias.astype(jnp.float32).reshape(1, d_hid)
    return y.astype(weight.dtype)


if __name__ == "__main__":
    # Small shapes implied by forward(): x = (num_nodes, input_dim).
    N, INPUT_DIM, HIDDEN_DIM = 20, 32, 16

    key = jax.random.PRNGKey(0)
    kx, kw, kb = jax.random.split(key, 3)

    x = jax.random.normal(kx, (N, INPUT_DIM), dtype=jnp.float32)
    # Deterministic synthetic Linear params (PyTorch layout: (hidden, input)).
    weight = jax.random.normal(kw, (HIDDEN_DIM, INPUT_DIM), dtype=jnp.float32) * 0.1
    bias = jax.random.normal(kb, (HIDDEN_DIM,), dtype=jnp.float32) * 0.1

    ref = jnp.max(x, axis=0, keepdims=True) @ weight.T + bias

    # 1) Default path (auto tile size / split count for the local chip).
    out = jax.block_until_ready(pooling_agg(x, weight, bias))
    assert out.shape == (1, HIDDEN_DIM)
    assert jnp.allclose(out, ref, atol=1e-5, rtol=1e-5)

    # 2) Multi-tile streaming + ragged tail + 2-way N split (the v7x path;
    #    runs sequentially on 1-TC chips, same numerics).
    out2 = jax.block_until_ready(pooling_agg(x, weight, bias, tile_n=8, num_splits=2))
    assert jnp.allclose(out2, ref, atol=1e-5, rtol=1e-5)

    # 3) bf16 input path (exercises the 16-row sublane multiple + ragged mask).
    xb = x.astype(jnp.bfloat16)
    refb = jnp.max(xb, axis=0, keepdims=True).astype(jnp.float32) @ weight.T + bias
    out3 = jax.block_until_ready(pooling_agg(xb, weight, bias, tile_n=16, num_splits=1))
    assert jnp.allclose(out3, refb, atol=1e-4, rtol=1e-4)

    print("KERNEL_OK")
</pallas_src>

<mosaic_0001>
module attributes {stable_mosaic.version = 11 : i64} {
  func.func @_max_reduce_kernel(%arg0: i32, %arg1: i32, %arg2: memref<24x32xf32, #tpu.memory_space<vmem>>, %arg3: memref<8x32xf32, #tpu.memory_space<vmem>>, %arg4: memref<8x32xf32, #tpu.memory_space<vmem>>) attributes {dimension_semantics = [#tpu.dimension_semantics<parallel>, #tpu.dimension_semantics<arbitrary>], iteration_bounds = array<i64: 1, 1>, scalar_prefetch = 0 : i64, scratch_operands = 1 : i64, tpu.core_type = #tpu.core_type<tc>, window_params = [{transform_indices = @transform_0, window_bounds = array<i64: 24, 32>}, {transform_indices = @transform_1, window_bounds = array<i64: 8, 32>}]} {
    %c0_i32 = arith.constant 0 : i32
    %0 = arith.cmpi eq, %arg1, %c0_i32 : i32
    %1 = arith.extui %0 : i1 to i32
    %c0_i32_0 = arith.constant 0 : i32
    %2 = arith.cmpi ne, %1, %c0_i32_0 : i32
    scf.if %2 {
      %cst = arith.constant 0xFF800000 : f32
      %16 = vector.broadcast %cst : f32 to vector<8x32xf32>
      %c0 = arith.constant 0 : index
      %c0_6 = arith.constant 0 : index
      %17 = vector.load %arg4[%c0, %c0_6] : memref<8x32xf32, #tpu.memory_space<vmem>>, vector<8x32xf32>
      tpu.vector_store %arg4[%c0, %c0_6], %16 {strides = array<i32>} : memref<8x32xf32, #tpu.memory_space<vmem>>, vector<8x32xf32>,
    } else {
    }
    %c1_i32 = arith.constant 1 : i32
    %3 = arith.muli %arg0, %c1_i32 : i32
    %4 = arith.addi %3, %arg1 : i32
    %c24_i32 = arith.constant 24 : i32
    %5 = arith.muli %4, %c24_i32 : i32
    %c24_i32_1 = arith.constant 24 : i32
    %6 = arith.addi %5, %c24_i32_1 : i32
    %c20_i32 = arith.constant 20 : i32
    %7 = arith.cmpi sgt, %6, %c20_i32 : i32
    %true = arith.constant true
    %8 = arith.xori %7, %true : i1
    %9 = arith.extui %8 : i1 to i32
    %c0_i32_2 = arith.constant 0 : i32
    %10 = arith.cmpi ne, %9, %c0_i32_2 : i32
    scf.if %10 {
      %c0 = arith.constant 0 : index
      %c0_6 = arith.constant 0 : index
      %16 = vector.load %arg2[%c0, %c0_6] : memref<24x32xf32, #tpu.memory_space<vmem>>, vector<24x32xf32>
      %17 = vector.shape_cast %16 : vector<24x32xf32> to vector<3x8x32xf32>
      %cst = arith.constant dense<0xFF800000> : vector<8x32xf32>
      %18 = vector.multi_reduction <maximumf>, %17, %cst [0] : vector<3x8x32xf32> to vector<8x32xf32>
      %c0_7 = arith.constant 0 : index
      %c0_8 = arith.constant 0 : index
      %19 = vector.load %arg4[%c0_7, %c0_8] : memref<8x32xf32, #tpu.memory_space<vmem>>, vector<8x32xf32>
      %20 = arith.maximumf %19, %18 : vector<8x32xf32>
      %c0_9 = arith.constant 0 : index
      %c0_10 = arith.constant 0 : index
      %21 = vector.load %arg4[%c0_9, %c0_10] : memref<8x32xf32, #tpu.memory_space<vmem>>, vector<8x32xf32>
      tpu.vector_store %arg4[%c0_9, %c0_10], %20 {strides = array<i32>} : memref<8x32xf32, #tpu.memory_space<vmem>>, vector<8x32xf32>,
    } else {
    }
    %11 = arith.extui %7 : i1 to i32
    %c0_i32_3 = arith.constant 0 : i32
    %12 = arith.cmpi ne, %11, %c0_i32_3 : i32
    scf.if %12 {
      %c0 = arith.constant 0 : index
      %c0_6 = arith.constant 0 : index
      %16 = vector.load %arg2[%c0, %c0_6] : memref<24x32xf32, #tpu.memory_space<vmem>>, vector<24x32xf32>
      %17 = tpu.iota {dimensions = array<i32: 0>} : vector<24x32xi32>
      %18 = vector.broadcast %5 : i32 to vector<24x32xi32>
      %19 = arith.addi %17, %18 : vector<24x32xi32>
      %c20_i32_7 = arith.constant 20 : i32
      %20 = vector.broadcast %c20_i32_7 : i32 to vector<24x32xi32>
      %21 = arith.cmpi slt, %19, %20 : vector<24x32xi32>
      %cst = arith.constant 0xFF800000 : f32
      %22 = vector.broadcast %cst : f32 to vector<24x32xf32>
      %23 = arith.select %21, %16, %22 : vector<24x32xi1>, vector<24x32xf32>
      %24 = vector.shape_cast %23 : vector<24x32xf32> to vector<3x8x32xf32>
      %cst_8 = arith.constant dense<0xFF800000> : vector<8x32xf32>
      %25 = vector.multi_reduction <maximumf>, %24, %cst_8 [0] : vector<3x8x32xf32> to vector<8x32xf32>
      %c0_9 = arith.constant 0 : index
      %c0_10 = arith.constant 0 : index
      %26 = vector.load %arg4[%c0_9, %c0_10] : memref<8x32xf32, #tpu.memory_space<vmem>>, vector<8x32xf32>
      %27 = arith.maximumf %26, %25 : vector<8x32xf32>
      %c0_11 = arith.constant 0 : index
      %c0_12 = arith.constant 0 : index
      %28 = vector.load %arg4[%c0_11, %c0_12] : memref<8x32xf32, #tpu.memory_space<vmem>>, vector<8x32xf32>
      tpu.vector_store %arg4[%c0_11, %c0_12], %27 {strides = array<i32>} : memref<8x32xf32, #tpu.memory_space<vmem>>, vector<8x32xf32>,
    } else {
    }
    %c0_i32_4 = arith.constant 0 : i32
    %13 = arith.cmpi eq, %arg1, %c0_i32_4 : i32
    %14 = arith.extui %13 : i1 to i32
    %c0_i32_5 = arith.constant 0 : i32
    %15 = arith.cmpi ne, %14, %c0_i32_5 : i32
    scf.if %15 {
      %c0 = arith.constant 0 : index
      %c0_6 = arith.constant 0 : index
      %16 = vector.load %arg4[%c0, %c0_6] : memref<8x32xf32, #tpu.memory_space<vmem>>, vector<8x32xf32>
      %c0_7 = arith.constant 0 : index
      %c0_8 = arith.constant 0 : index
      %17 = vector.load %arg3[%c0_7, %c0_8] : memref<8x32xf32, #tpu.memory_space<vmem>>, vector<8x32xf32>
      tpu.vector_store %arg3[%c0_7, %c0_8], %16 {strides = array<i32>} : memref<8x32xf32, #tpu.memory_space<vmem>>, vector<8x32xf32>,
    } else {
    }
    return
  }
  func.func @transform_0(%arg0: i32, %arg1: i32) -> (i32, i32) {
    %c1_i32 = arith.constant 1 : i32
    %0 = arith.muli %arg0, %c1_i32 : i32
    %1 = arith.addi %0, %arg1 : i32
    %c0_i32 = arith.constant 0 : i32
    %c0_i32_0 = arith.constant 0 : i32
    return %1, %c0_i32 : i32, i32
  }
  func.func @transform_1(%arg0: i32, %arg1: i32) -> (i32, i32) {
    %c0_i32 = arith.constant 0 : i32
    %c0_i32_0 = arith.constant 0 : i32
    return %arg0, %c0_i32 : i32, i32
  }
}

</mosaic_0001>

<llo_original>
// kernel: tpu_custom_call.1
$region0: #{tpu_custom_call.1}
  #allocation0 [shape = 'u32[]', space=smem, size = 0x4, offset = 0x4, fixed_abs, tag = 'smem constant byte address 0x4 - core index']
  #allocation1 [shape = 'u32[144,128]{1,0:T(1,128)}', space=vmem, size = 0x12000, scoped, tag = 'internal scratch']
  #allocation2 [shape = 'f32[8,32]{1,0:T(8,128)}', space=vmem, size = 0x1000, scoped, tag = 'scratch operand']
  %s0 = inlined_call_operand.hbm [shape: f32[20,32], index: 0, kind: input, shape index: {}]
  %s1 = inlined_call_operand.hbm [shape: f32[8,32], index: 1, kind: output, shape index: {}]
  %s2 = sld [smem:[#allocation0]]
  $region34: #{tpu_custom_call.1} parent=0
    _
  %s4 = ssub.s32 1, %s2
  %s5 = scalar_select 0, %s4, %s2
  $region1: #{tpu_custom_call.1} parent=0
    #allocation3 [shape = 'u8[12288]{0}', space=vmem, size = 0x3000, scoped, tag = 'input window, operand 0, single buffered']
    #allocation4 [shape = 's32[1]{0}', space=sflag, size = 0x4, scoped, tag = 'scoped memory for tpu_custom_call.1']
    #allocation5 [shape = 's32[1]{0}', space=sflag, size = 0x4, scoped, tag = 'scoped memory for tpu_custom_call.1']
    #allocation6 [shape = 'u8[4096]{0}', space=vmem, size = 0x1000, scoped, tag = 'output window, operand 0, single buffered']
    %6 = vsyncpa [#allocation4], 0
    %7 = vsyncpa [#allocation5], 0
    // Predicated region
    $region2: #{tpu_custom_call.1} parent=1 // pred_check
      _
    $region3: #{tpu_custom_call.1} parent=1 // pred_check_branch
      %9 = sbr.rel (0) target = $region5
    $region4: #{tpu_custom_call.1} parent=1 // pred_region
      %s10 = sadd.s32 0, 0
      %s11 = smul.u32 3, %s10
      %s13 = ssub.s32 384, 384
      %14 = vsyncadd [#allocation4], %s13
      %s15 = smul.addr %s11, 128
      %s16 = scalar_lea.hbm %s0, %s15
      %s17 = sshll.u32 [#allocation3], 4
      %s18 = int_to_ptr.vmem [resolvable:$true] %s17
      %23 = dma.hbm_to_vmem [thread:$0]  %s16, 384, %s18, [#allocation4], 128, 128, 8
    $region5: #{tpu_custom_call.1} parent=1 // pred_fallthru
      _
    // Predicated region
    $region6: #{tpu_custom_call.1} parent=1 // pred_check
      _
    $region7: #{tpu_custom_call.1} parent=1 // pred_check_branch
      %25 = sbr.rel (0) target = $region9
    $region8: #{tpu_custom_call.1} parent=1 // pred_region
      %26 = dma.done [#allocation4], 384
    $region9: #{tpu_custom_call.1} parent=1 // pred_fallthru
      _
    %s27 = sadd.s32 0, 0
    %s28 = smul.u32 3, %s27
    %p29 = scmp.eq.s32.totalorder 0, 0
    // Predicated region
    $region10: #{tpu_custom_call.1} parent=1 // pred_check
      %p30 = pneg %p29
    $region11: #{tpu_custom_call.1} parent=1 // pred_check_branch
      %32 = sbr.rel (%p30) target = $region13
    $region12: #{tpu_custom_call.1} parent=1 // pred_region
      %vm33 = vcmask 261120
      %34 = vst.msk [vmem:[#allocation2] sm:$0xff] %vm33, -inf
    $region13: #{tpu_custom_call.1} parent=1 // pred_fallthru
      _
    %s35 = sadd.s32 0, 0
    %s36 = smul.u32 %s35, 24
    %s37 = sadd.s32 %s36, 24
    %p38 = scmp.gt.s32.totalorder %s37, 20
    %p39 = scmp.le.s32.totalorder %s37, 20
    // Predicated region
    $region14: #{tpu_custom_call.1} parent=1 // pred_check
      %p40 = pneg %p39
    $region15: #{tpu_custom_call.1} parent=1 // pred_check_branch
      %42 = sbr.rel (%p40) target = $region17
    $region16: #{tpu_custom_call.1} parent=1 // pred_region
      %v43 = vld [vmem:[#allocation3] sm:$0xff]
      %v44 = vld [vmem:[#allocation3 + $0x8] sm:$0xff]
      %v45 = vld [vmem:[#allocation3 + $0x10] sm:$0xff]
      %vm46 = vcmask 261120
      %v47 = vsel %vm46, %v43, -inf
      %v48 = vsel %vm46, %v44, -inf
      %v49 = vsel %vm46, %v45, -inf
      %v50 = vmax.f32 %v47, %v48
      %v51 = vmax.f32 %v50, %v49
      %v52 = vld [vmem:[#allocation2] sm:$0xff]
      %v53 = vmax.f32 %v52, %v51
      %54 = vst.msk [vmem:[#allocation2] sm:$0xff] %vm46, %v53
    $region17: #{tpu_custom_call.1} parent=1 // pred_fallthru
      _
    // Predicated region
    $region18: #{tpu_custom_call.1} parent=1 // pred_check
      %p55 = pneg %p38
    $region19: #{tpu_custom_call.1} parent=1 // pred_check_branch
      %57 = sbr.rel (%p55) target = $region21
    $region20: #{tpu_custom_call.1} parent=1 // pred_region
      %v58 = vld [vmem:[#allocation3] sm:$0xff]
      %v59 = vld [vmem:[#allocation3 + $0x8] sm:$0xff]
      %v60 = vld [vmem:[#allocation3 + $0x10] sm:$0xff]
      %v61 = vlaneseq
      %v62 = vshrl.u32 %v61, 7
      %v63 = vadd.s32 %v62, 8
      %v64 = vadd.s32 %v62, 16
      %v65 = vstv %s36
      %v66 = vadd.s32 %v62, %v65
      %v67 = vadd.s32 %v63, %v65
      %v68 = vadd.s32 %v64, %v65
      %vm69 = vcmp.lt.s32.totalorder %v66, 20
      %vm70 = vcmp.lt.s32.totalorder %v67, 20
      %vm71 = vcmp.lt.s32.totalorder %v68, 20
      %v72 = vsel %vm69, %v58, -inf
      %v73 = vsel %vm70, %v59, -inf
      %v74 = vsel %vm71, %v60, -inf
      %vm75 = vcmask 261120
      %v76 = vsel %vm75, %v72, -inf
      %v77 = vsel %vm75, %v73, -inf
      %v78 = vsel %vm75, %v74, -inf
      %v79 = vmax.f32 %v76, %v77
      %v80 = vmax.f32 %v79, %v78
      %v81 = vld [vmem:[#allocation2] sm:$0xff]
      %v82 = vmax.f32 %v81, %v80
      %83 = vst.msk [vmem:[#allocation2] sm:$0xff] %vm75, %v82
    $region21: #{tpu_custom_call.1} parent=1 // pred_fallthru
      _
    // Predicated region
    $region22: #{tpu_custom_call.1} parent=1 // pred_check
      %p84 = pneg %p29
    $region23: #{tpu_custom_call.1} parent=1 // pred_check_branch
      %86 = sbr.rel (%p84) target = $region25
    $region24: #{tpu_custom_call.1} parent=1 // pred_region
      %v87 = vld [vmem:[#allocation2] sm:$0xff]
      %vm88 = vcmask 261120
      %89 = vst.msk [vmem:[#allocation6] sm:$0xff] %vm88, %v87
    $region25: #{tpu_custom_call.1} parent=1 // pred_fallthru
      _
    // Predicated region
    $region26: #{tpu_custom_call.1} parent=1 // pred_check
      _
    $region27: #{tpu_custom_call.1} parent=1 // pred_check_branch
      %91 = sbr.rel (0) target = $region29
    $region28: #{tpu_custom_call.1} parent=1 // pred_region
      %s93 = ssub.s32 128, 128
      %94 = vsyncadd [#allocation5], %s93
      %s96 = sshll.u32 [#allocation6], 4
      %s97 = int_to_ptr.vmem [resolvable:$true] %s96
      %99 = dma.vmem_to_hbm [thread:$0]  %s97, 128, %s1, [#allocation5]
    $region29: #{tpu_custom_call.1} parent=1 // pred_fallthru
      _
    // Predicated region
    $region30: #{tpu_custom_call.1} parent=1 // pred_check
      _
    $region31: #{tpu_custom_call.1} parent=1 // pred_check_branch
      %101 = sbr.rel (0) target = $region33
    $region32: #{tpu_custom_call.1} parent=1 // pred_region
      %102 = dma.done [#allocation5], 128
    $region33: #{tpu_custom_call.1} parent=1 // pred_fallthru
      _
    %103 = vsyncpa [#allocation4], 1
    %104 = vsyncpa [#allocation5], 1

</llo_original>
